<compile_context>
chip_gen: v6e
topology: v6e:2x2x1
jax: 0.10.0
libtpu: 0.0.40
codegen_flags: <defaults>
</compile_context>

<pallas_src>
import jax
import jax.numpy as jnp
from jax.experimental import pallas as pl
from jax.experimental.pallas import tpu as pltpu

_LANE = 128
_SUBLANE = 8


def _fused_mlp_kernel(x_ref, w1b1_ref, w2b2_ref, o_ref):
    """o = relu(x @ W1 + b1) @ W2 + b2.

    w1b1 = [W1; b1]  shape (D_in+1, H)      (bias as last row)
    w2b2 = [W2; b2]  shape (H+1, C_pad)     (bias as last row, C padded to 128)
    """
    d_in = x_ref.shape[1]            # static
    hidden = w2b2_ref.shape[0] - 1   # static

    w1 = w1b1_ref[:d_in, :]                                   # (D_in, H)
    b1 = w1b1_ref[d_in:d_in + 1, :].astype(jnp.float32)       # (1, H)
    w2 = w2b2_ref[:hidden, :]                                  # (H, C_pad)
    b2 = w2b2_ref[hidden:hidden + 1, :].astype(jnp.float32)   # (1, C_pad)

    # Cast x to the weight dtype *in VMEM* (no extra HBM pass outside).
    x = x_ref[...].astype(w1.dtype)
    h = jnp.dot(x, w1, preferred_element_type=jnp.float32)     # MXU, f32 acc
    h = jnp.maximum(h + b1, 0.0)                               # f32 VPU epilogue
    out = jnp.dot(h.astype(w2.dtype), w2,
                  preferred_element_type=jnp.float32)          # MXU, f32 acc
    o_ref[...] = (out + b2).astype(o_ref.dtype)                # lane-dense store


def fuse_params(w1, b1, w2, b2, *, dtype=jnp.float32):
    """One-time parameter prep: fold biases into weights, pad classes to 128.

    w1: (D_in, H), b1: (H,), w2: (H, C), b2: (C,)  (weights pre-transposed vs
    nn.Linear storage).  dtype=jnp.bfloat16 halves weight/activation DMA on
    v6e/v7x (accumulation in the kernel stays f32).
    Returns (w1b1, w2b2, num_classes).
    """
    d_in, hidden = w1.shape
    num_classes = w2.shape[1]
    c_pad = max(_LANE, pl.cdiv(num_classes, _LANE) * _LANE)

    w1b1 = jnp.concatenate(
        [w1.astype(jnp.float32), b1.reshape(1, hidden).astype(jnp.float32)],
        axis=0).astype(dtype)                                  # (D_in+1, H)

    w2_pad = jnp.zeros((hidden, c_pad), jnp.float32).at[:, :num_classes].set(
        w2.astype(jnp.float32))
    b2_pad = jnp.zeros((1, c_pad), jnp.float32).at[0, :num_classes].set(
        b2.reshape(-1).astype(jnp.float32))
    w2b2 = jnp.concatenate([w2_pad, b2_pad], axis=0).astype(dtype)  # (H+1, C_pad)
    return w1b1, w2b2, num_classes


def simple_nn_forward(x, w1b1, w2b2, num_classes, *, batch_tile=4096):
    """Fused forward: relu(x @ W1 + b1) @ W2 + b2  ->  (B, num_classes)."""
    b, d_in = x.shape
    hidden = w2b2.shape[0] - 1
    c_pad = w2b2.shape[1]
    assert w1b1.shape == (d_in + 1, hidden)

    if b <= batch_tile:
        # Small/medium batch: single-shot, gridless; whole arrays in VMEM.
        out_pad = pl.pallas_call(
            _fused_mlp_kernel,
            out_shape=jax.ShapeDtypeStruct((b, c_pad), jnp.float32),
            in_specs=[pl.BlockSpec(memory_space=pltpu.MemorySpace.VMEM)
                      for _ in range(3)],
            out_specs=pl.BlockSpec(memory_space=pltpu.MemorySpace.VMEM),
        )(x, w1b1, w2b2)
        return out_pad[:, :num_classes]

    # Large batch: minimum number of batch tiles, weights VMEM-resident.
    nb = pl.cdiv(b, batch_tile)
    tile = pl.cdiv(b, nb)
    tile = pl.cdiv(tile, _SUBLANE) * _SUBLANE        # round up to sublane (8)
    b_pad = nb * tile
    x_in = x if b_pad == b else jnp.pad(x, ((0, b_pad - b), (0, 0)))

    # VMEM budget: x block is lane-padded to 128 lanes regardless of d_in.
    w_bytes = (w1b1.size * w1b1.dtype.itemsize
               + w2b2.size * w2b2.dtype.itemsize)
    x_blk_bytes = tile * _LANE * x.dtype.itemsize
    out_blk_bytes = tile * c_pad * 4
    vmem_est = 2 * (x_blk_bytes + out_blk_bytes) + 2 * w_bytes + (2 << 20)
    vmem_limit = int(min(max(vmem_est, 32 << 20), 48 << 20))

    flops = 2 * b_pad * (d_in * hidden + hidden * c_pad)
    bytes_accessed = (b_pad * d_in * x.dtype.itemsize + w_bytes
                      + b_pad * c_pad * 4)

    out_pad = pl.pallas_call(
        _fused_mlp_kernel,
        out_shape=jax.ShapeDtypeStruct((b_pad, c_pad), jnp.float32),
        grid=(nb,),
        in_specs=[
            pl.BlockSpec((tile, d_in), lambda i: (i, 0)),
            pl.BlockSpec((d_in + 1, hidden), lambda i: (0, 0)),
            pl.BlockSpec((hidden + 1, c_pad), lambda i: (0, 0)),
        ],
        out_specs=pl.BlockSpec((tile, c_pad), lambda i: (i, 0)),
        compiler_params=pltpu.CompilerParams(
            dimension_semantics=("parallel",),        # 2 TCs on v7x
            vmem_limit_bytes=vmem_limit),
        cost_estimate=pl.CostEstimate(flops=flops, transcendentals=0,
                                      bytes_accessed=bytes_accessed),
    )(x_in, w1b1, w2b2)

    return out_pad[:b, :num_classes]                  # single fused slice


if __name__ == "__main__":
    # input_size = 32 features, hidden = 128 (fixed in module), num_classes = 10
    B, D_IN, HIDDEN, NUM_CLASSES = 8, 32, 128, 10

    key = jax.random.PRNGKey(0)
    kx, kw1, kb1, kw2, kb2, kx2 = jax.random.split(key, 6)

    x = jax.random.normal(kx, (B, D_IN), dtype=jnp.float32)

    # PyTorch-like uniform fan-in init (weights stored pre-transposed).
    bound1 = 1.0 / (D_IN ** 0.5)
    w1 = jax.random.uniform(kw1, (D_IN, HIDDEN), jnp.float32, -bound1, bound1)
    b1 = jax.random.uniform(kb1, (HIDDEN,), jnp.float32, -bound1, bound1)
    bound2 = 1.0 / (HIDDEN ** 0.5)
    w2 = jax.random.uniform(kw2, (HIDDEN, NUM_CLASSES), jnp.float32, -bound2, bound2)
    b2 = jax.random.uniform(kb2, (NUM_CLASSES,), jnp.float32, -bound2, bound2)

    def ref_fwd(xx):
        xf = xx.astype(jnp.float32)
        return jnp.maximum(xf @ w1 + b1[None, :], 0.0) @ w2 + b2[None, :]

    # 1) Small-batch (gridless) path, f32 params: tight tolerance.
    w1b1_f32, w2b2_f32, nc = fuse_params(w1, b1, w2, b2, dtype=jnp.float32)
    out = jax.block_until_ready(simple_nn_forward(x, w1b1_f32, w2b2_f32, nc))
    assert out.shape == (B, NUM_CLASSES)
    assert jnp.allclose(out, ref_fwd(x), atol=1e-5, rtol=1e-5)

    # 2) Large-batch grid path: 2 tiles of 4096 (one per TC on v7x, no pad,
    #    no external x cast), bf16 params/input to halve DMA bytes.
    B_BIG = 8192
    x_big = jax.random.normal(kx2, (B_BIG, D_IN), jnp.float32).astype(jnp.bfloat16)
    w1b1_bf, w2b2_bf, _ = fuse_params(w1, b1, w2, b2, dtype=jnp.bfloat16)
    out_big = jax.block_until_ready(
        simple_nn_forward(x_big, w1b1_bf, w2b2_bf, nc, batch_tile=4096))
    assert out_big.shape == (B_BIG, NUM_CLASSES)
    assert jnp.allclose(out_big, ref_fwd(x_big), atol=5e-2, rtol=5e-2)

    print("KERNEL_OK")
</pallas_src>

<mosaic_0001>
module attributes {stable_mosaic.version = 11 : i64} {
  func.func @_fused_mlp_kernel(%arg0: memref<8x32xf32, #tpu.memory_space<vmem>>, %arg1: memref<33x128xf32, #tpu.memory_space<vmem>>, %arg2: memref<129x128xf32, #tpu.memory_space<vmem>>, %arg3: memref<8x128xf32, #tpu.memory_space<vmem>>) attributes {dimension_semantics = [], scalar_prefetch = 0 : i64, scratch_operands = 0 : i64, tpu.core_type = #tpu.core_type<tc>} {
    %c0 = arith.constant 0 : index
    %c0_0 = arith.constant 0 : index
    %0 = vector.load %arg1[%c0, %c0_0] : memref<33x128xf32, #tpu.memory_space<vmem>>, vector<32x128xf32>
    %c32 = arith.constant 32 : index
    %c0_1 = arith.constant 0 : index
    %1 = vector.load %arg1[%c32, %c0_1] : memref<33x128xf32, #tpu.memory_space<vmem>>, vector<1x128xf32>
    %c0_2 = arith.constant 0 : index
    %c0_3 = arith.constant 0 : index
    %2 = vector.load %arg2[%c0_2, %c0_3] : memref<129x128xf32, #tpu.memory_space<vmem>>, vector<128x128xf32>
    %c128 = arith.constant 128 : index
    %c0_4 = arith.constant 0 : index
    %3 = vector.load %arg2[%c128, %c0_4] : memref<129x128xf32, #tpu.memory_space<vmem>>, vector<1x128xf32>
    %c0_5 = arith.constant 0 : index
    %c0_6 = arith.constant 0 : index
    %4 = vector.load %arg0[%c0_5, %c0_6] : memref<8x32xf32, #tpu.memory_space<vmem>>, vector<8x32xf32>
    %cst = arith.constant dense<0.000000e+00> : vector<8x128xf32>
    %5 = tpu.matmul %4, %0, %cst {dimension_numbers = #tpu.dot_dimension_numbers<[1], [0], [0], [1], [0, 0, 1, 1], [], []>} : vector<8x32xf32>, vector<32x128xf32>, vector<8x128xf32> -> vector<8x128xf32>
    %6 = vector.broadcast %1 : vector<1x128xf32> to vector<8x128xf32>
    %7 = arith.addf %5, %6 : vector<8x128xf32>
    %cst_7 = arith.constant 0.000000e+00 : f32
    %8 = vector.broadcast %cst_7 : f32 to vector<8x128xf32>
    %9 = arith.maximumf %7, %8 : vector<8x128xf32>
    %cst_8 = arith.constant dense<0.000000e+00> : vector<8x128xf32>
    %10 = tpu.matmul %9, %2, %cst_8 {dimension_numbers = #tpu.dot_dimension_numbers<[1], [0], [0], [1], [0, 0, 1, 1], [], []>} : vector<8x128xf32>, vector<128x128xf32>, vector<8x128xf32> -> vector<8x128xf32>
    %11 = vector.broadcast %3 : vector<1x128xf32> to vector<8x128xf32>
    %12 = arith.addf %10, %11 : vector<8x128xf32>
    %c0_9 = arith.constant 0 : index
    %c0_10 = arith.constant 0 : index
    %13 = vector.load %arg3[%c0_9, %c0_10] : memref<8x128xf32, #tpu.memory_space<vmem>>, vector<8x128xf32>
    tpu.vector_store %arg3[%c0_9, %c0_10], %12 {strides = array<i32>} : memref<8x128xf32, #tpu.memory_space<vmem>>, vector<8x128xf32>,
    return
  }
}

</mosaic_0001>

<llo_original>
// kernel: tpu_custom_call.1
$region0: #{tpu_custom_call.1}
  #allocation0 [shape = 'u32[]', space=smem, size = 0x4, offset = 0x4, fixed_abs, tag = 'smem constant byte address 0x4 - core index']
  #allocation1 [shape = 'u32[144,128]{1,0:T(1,128)}', space=vmem, size = 0x12000, scoped, tag = 'internal scratch']
  %s0 = inlined_call_operand.hbm [shape: f32[8,32], index: 0, kind: input, shape index: {}]
  %s1 = inlined_call_operand.hbm [shape: f32[33,128], index: 1, kind: input, shape index: {}]
  %s2 = inlined_call_operand.hbm [shape: f32[129,128], index: 2, kind: input, shape index: {}]
  %s3 = inlined_call_operand.hbm [shape: f32[8,128], index: 3, kind: output, shape index: {}]
  %s4 = sld [smem:[#allocation0]]
  $region34: #{tpu_custom_call.1} parent=0
    _
  %s6 = ssub.s32 1, %s4
  %s7 = scalar_select 0, %s6, %s4
  $region1: #{tpu_custom_call.1} parent=0
    #allocation2 [shape = 'u8[4096]{0}', space=vmem, size = 0x1000, scoped, tag = 'input window, operand 0, single buffered']
    #allocation3 [shape = 's32[1]{0}', space=sflag, size = 0x4, scoped, tag = 'scoped memory for tpu_custom_call.1']
    #allocation4 [shape = 's32[1]{0}', space=sflag, size = 0x4, scoped, tag = 'scoped memory for tpu_custom_call.1']
    #allocation5 [shape = 'u8[20480]{0}', space=vmem, size = 0x5000, scoped, tag = 'input window, operand 1, single buffered']
    #allocation6 [shape = 's32[1]{0}', space=sflag, size = 0x4, scoped, tag = 'scoped memory for tpu_custom_call.1']
    #allocation7 [shape = 'u8[69632]{0}', space=vmem, size = 0x11000, scoped, tag = 'input window, operand 2, single buffered']
    #allocation8 [shape = 'u8[4096]{0}', space=vmem, size = 0x1000, scoped, tag = 'output window, operand 0, single buffered']
    %8 = vsyncpa [#allocation3], 0
    %9 = vsyncpa [#allocation6], 0
    %10 = vsyncpa [#allocation4], 0
    // Predicated region
    $region2: #{tpu_custom_call.1} parent=1 // pred_check
      _
    $region3: #{tpu_custom_call.1} parent=1 // pred_check_branch
      %12 = sbr.rel (0) target = $region5
    $region4: #{tpu_custom_call.1} parent=1 // pred_region
      %s14 = ssub.s32 128, 128
      %15 = vsyncadd [#allocation3], %s14
      %s17 = sshll.u32 [#allocation2], 4
      %s18 = int_to_ptr.vmem [resolvable:$true] %s17
      %20 = dma.hbm_to_vmem [thread:$0]  %s0, 128, %s18, [#allocation3]
    $region5: #{tpu_custom_call.1} parent=1 // pred_fallthru
      _
    // Predicated region
    $region6: #{tpu_custom_call.1} parent=1 // pred_check
      _
    $region7: #{tpu_custom_call.1} parent=1 // pred_check_branch
      %22 = sbr.rel (0) target = $region9
    $region8: #{tpu_custom_call.1} parent=1 // pred_region
      %s24 = ssub.s32 640, 640
      %25 = vsyncadd [#allocation6], %s24
      %s26 = sshll.u32 [#allocation5], 4
      %s27 = int_to_ptr.vmem [resolvable:$true] %s26
      %32 = dma.hbm_to_vmem [thread:$0]  %s1, 640, %s27, [#allocation6], 128, 128, 8
    $region9: #{tpu_custom_call.1} parent=1 // pred_fallthru
      _
    // Predicated region
    $region10: #{tpu_custom_call.1} parent=1 // pred_check
      _
    $region11: #{tpu_custom_call.1} parent=1 // pred_check_branch
      %34 = sbr.rel (0) target = $region13
    $region12: #{tpu_custom_call.1} parent=1 // pred_region
      %s36 = ssub.s32 2176, 2176
      %37 = vsyncadd [#allocation6], %s36
      %s38 = sshll.u32 [#allocation7], 4
      %s39 = int_to_ptr.vmem [resolvable:$true] %s38
      %44 = dma.hbm_to_vmem [thread:$0]  %s2, 2176, %s39, [#allocation6], 128, 128, 8
    $region13: #{tpu_custom_call.1} parent=1 // pred_fallthru
      _
    // Predicated region
    $region14: #{tpu_custom_call.1} parent=1 // pred_check
      _
    $region15: #{tpu_custom_call.1} parent=1 // pred_check_branch
      %46 = sbr.rel (0) target = $region17
    $region16: #{tpu_custom_call.1} parent=1 // pred_region
      %47 = dma.done [#allocation3], 128
    $region17: #{tpu_custom_call.1} parent=1 // pred_fallthru
      _
    // Predicated region
    $region18: #{tpu_custom_call.1} parent=1 // pred_check
      _
    $region19: #{tpu_custom_call.1} parent=1 // pred_check_branch
      %49 = sbr.rel (0) target = $region21
    $region20: #{tpu_custom_call.1} parent=1 // pred_region
      %50 = dma.done [#allocation6], 640
    $region21: #{tpu_custom_call.1} parent=1 // pred_fallthru
      _
    // Predicated region
    $region22: #{tpu_custom_call.1} parent=1 // pred_check
      _
    $region23: #{tpu_custom_call.1} parent=1 // pred_check_branch
      %52 = sbr.rel (0) target = $region25
    $region24: #{tpu_custom_call.1} parent=1 // pred_region
      %53 = dma.done [#allocation6], 2176
    $region25: #{tpu_custom_call.1} parent=1 // pred_fallthru
      _
    %v54 = vld [vmem:[#allocation5] sm:$0xff]
    %v55 = vld [vmem:[#allocation5 + $0x8] sm:$0xff]
    %v56 = vld [vmem:[#allocation5 + $0x10] sm:$0xff]
    %v57 = vld [vmem:[#allocation5 + $0x18] sm:$0xff]
    %v58 = vld [vmem:[#allocation5 + $0x20] sm:$0x1]
    %v59 = vld [vmem:[#allocation7] sm:$0xff]
    %v60 = vld [vmem:[#allocation7 + $0x8] sm:$0xff]
    %v61 = vld [vmem:[#allocation7 + $0x10] sm:$0xff]
    %v62 = vld [vmem:[#allocation7 + $0x18] sm:$0xff]
    %v63 = vld [vmem:[#allocation7 + $0x20] sm:$0xff]
    %v64 = vld [vmem:[#allocation7 + $0x28] sm:$0xff]
    %v65 = vld [vmem:[#allocation7 + $0x30] sm:$0xff]
    %v66 = vld [vmem:[#allocation7 + $0x38] sm:$0xff]
    %v67 = vld [vmem:[#allocation7 + $0x40] sm:$0xff]
    %v68 = vld [vmem:[#allocation7 + $0x48] sm:$0xff]
    %v69 = vld [vmem:[#allocation7 + $0x50] sm:$0xff]
    %v70 = vld [vmem:[#allocation7 + $0x58] sm:$0xff]
    %v71 = vld [vmem:[#allocation7 + $0x60] sm:$0xff]
    %v72 = vld [vmem:[#allocation7 + $0x68] sm:$0xff]
    %v73 = vld [vmem:[#allocation7 + $0x70] sm:$0xff]
    %v74 = vld [vmem:[#allocation7 + $0x78] sm:$0xff]
    %v75 = vld [vmem:[#allocation7 + $0x80] sm:$0x1]
    %v76 = vld [vmem:[#allocation2] sm:$0xff]
    %v77 = vlaneseq
    %v78 = vshrl.u32 %v77, 7
    %v79 = vsub.s32 0, %v78
    %v80 = vrot.slane %v58, %v79
    %vm81 = vcmask 261120
    %v83 = vsel %vm81, %v76, 0
    %85 = vmatprep.subr.mxu0 0.0
    %86 = vmatpush1.msra.mxu0 0.0
    %87 = vmatprep.subr.mxu0 0.0
    %88 = vmatpush1.msra.mxu0 0.0
    %89 = vmatprep.subr.mxu0 0.0
    %90 = vmatpush1.msra.mxu0 0.0
    %91 = vmatprep.subr.mxu0 0.0
    %92 = vmatpush1.msra.mxu0 0.0
    %93 = vmatprep.subr.mxu0 0.0
    %94 = vmatpush1.msra.mxu0 0.0
    %95 = vmatprep.subr.mxu0 0.0
    %96 = vmatpush1.msra.mxu0 0.0
    %97 = vmatprep.subr.mxu0 0.0
    %98 = vmatpush1.msra.mxu0 0.0
    %99 = vmatprep.subr.mxu0 0.0
    %100 = vmatpush1.msra.mxu0 0.0
    %101 = vmatprep.subr.mxu0 0.0
    %102 = vmatpush1.msra.mxu0 0.0
    %103 = vmatprep.subr.mxu0 0.0
    %104 = vmatpush1.msra.mxu0 0.0
    %105 = vmatprep.subr.mxu0 0.0
    %106 = vmatpush1.msra.mxu0 0.0
    %107 = vmatprep.subr.mxu0 0.0
    %108 = vmatpush1.msra.mxu0 0.0
    %109 = vmatprep.subr.mxu0 0.0
    %110 = vmatpush1.msra.mxu0 %v57
    %111 = vmatprep.subr.mxu0 0.0
    %112 = vmatpush1.msra.mxu0 %v56
    %113 = vmatprep.subr.mxu0 0.0
    %114 = vmatpush1.msra.mxu0 %v55
    %115 = vmatprep.subr.mxu0 0.0
    %116 = vmatpush1.msra.mxu0 %v54
    %117 = vmatprep.subr.mxu0 0.0
    %118 = vmatpush2.msra.mxu0 0.0
    %119 = vmatprep.subr.mxu0 0.0
    %120 = vmatpush2.msra.mxu0 0.0
    %121 = vmatprep.subr.mxu0 0.0
    %122 = vmatpush2.msra.mxu0 0.0
    %123 = vmatprep.subr.mxu0 0.0
    %124 = vmatpush2.msra.mxu0 0.0
    %125 = vmatprep.subr.mxu0 0.0
    %126 = vmatpush2.msra.mxu0 0.0
    %127 = vmatprep.subr.mxu0 0.0
    %128 = vmatpush2.msra.mxu0 0.0
    %129 = vmatprep.subr.mxu0 0.0
    %130 = vmatpush2.msra.mxu0 0.0
    %131 = vmatprep.subr.mxu0 0.0
    %132 = vmatpush2.msra.mxu0 0.0
    %133 = vmatprep.subr.mxu0 0.0
    %134 = vmatpush2.msra.mxu0 0.0
    %135 = vmatprep.subr.mxu0 0.0
    %136 = vmatpush2.msra.mxu0 0.0
    %137 = vmatprep.subr.mxu0 0.0
    %138 = vmatpush2.msra.mxu0 0.0
    %139 = vmatprep.subr.mxu0 0.0
    %140 = vmatpush2.msra.mxu0 0.0
    %141 = vmatprep.subr.mxu0 0.0
    %142 = vmatpush2.msra.mxu0 0.0
    %143 = vmatprep.subr.mxu0 0.0
    %144 = vmatpush2.msra.mxu0 0.0
    %145 = vmatprep.subr.mxu0 0.0
    %146 = vmatpush2.msra.mxu0 0.0
    %147 = vmatprep.subr.mxu0 0.0
    %148 = vmatpush2.msra.mxu0 0.0
    %149 = vmatprep.mubr.f32.mxu0 0.0
    %150 = vmatmul.mubr.f32.gmra.mxu0 %v83
    %v151 = vpop.f32.mrf.mxu0
    %v152 = vadd.f32 %v80, %v151
    %v153 = vpop.f32.mrf.mxu0
    %154 = vdwg.mxu0
    %v155 = vmax.f32 %v152, 0.0
    %v156 = vlaneseq
    %v157 = vshrl.u32 %v156, 7
    %v158 = vsub.s32 0, %v157
    %v159 = vrot.slane %v75, %v158
    %160 = vmatprep.subr.mxu0 0.0
    %161 = vmatpush1.msra.mxu0 %v74
    %162 = vmatprep.subr.mxu0 0.0
    %163 = vmatpush1.msra.mxu0 %v73
    %164 = vmatprep.subr.mxu0 0.0
    %165 = vmatpush1.msra.mxu0 %v72
    %166 = vmatprep.subr.mxu0 0.0
    %167 = vmatpush1.msra.mxu0 %v71
    %168 = vmatprep.subr.mxu0 0.0
    %169 = vmatpush1.msra.mxu0 %v70
    %170 = vmatprep.subr.mxu0 0.0
    %171 = vmatpush1.msra.mxu0 %v69
    %172 = vmatprep.subr.mxu0 0.0
    %173 = vmatpush1.msra.mxu0 %v68
    %174 = vmatprep.subr.mxu0 0.0
    %175 = vmatpush1.msra.mxu0 %v67
    %176 = vmatprep.subr.mxu0 0.0
    %177 = vmatpush1.msra.mxu0 %v66
    %178 = vmatprep.subr.mxu0 0.0
    %179 = vmatpush1.msra.mxu0 %v65
    %180 = vmatprep.subr.mxu0 0.0
    %181 = vmatpush1.msra.mxu0 %v64
    %182 = vmatprep.subr.mxu0 0.0
    %183 = vmatpush1.msra.mxu0 %v63
    %184 = vmatprep.subr.mxu0 0.0
    %185 = vmatpush1.msra.mxu0 %v62
    %186 = vmatprep.subr.mxu0 0.0
    %187 = vmatpush1.msra.mxu0 %v61
    %188 = vmatprep.subr.mxu0 0.0
    %189 = vmatpush1.msra.mxu0 %v60
    %190 = vmatprep.subr.mxu0 0.0
    %191 = vmatpush1.msra.mxu0 %v59
    %192 = vmatprep.subr.mxu0 0.0
    %193 = vmatpush2.msra.mxu0 0.0
    %194 = vmatprep.subr.mxu0 0.0
    %195 = vmatpush2.msra.mxu0 0.0
    %196 = vmatprep.subr.mxu0 0.0
    %197 = vmatpush2.msra.mxu0 0.0
    %198 = vmatprep.subr.mxu0 0.0
    %199 = vmatpush2.msra.mxu0 0.0
    %200 = vmatprep.subr.mxu0 0.0
    %201 = vmatpush2.msra.mxu0 0.0
    %202 = vmatprep.subr.mxu0 0.0
    %203 = vmatpush2.msra.mxu0 0.0
    %204 = vmatprep.subr.mxu0 0.0
    %205 = vmatpush2.msra.mxu0 0.0
    %206 = vmatprep.subr.mxu0 0.0
    %207 = vmatpush2.msra.mxu0 0.0
    %208 = vmatprep.subr.mxu0 0.0
    %209 = vmatpush2.msra.mxu0 0.0
    %210 = vmatprep.subr.mxu0 0.0
    %211 = vmatpush2.msra.mxu0 0.0
    %212 = vmatprep.subr.mxu0 0.0
    %213 = vmatpush2.msra.mxu0 0.0
    %214 = vmatprep.subr.mxu0 0.0
    %215 = vmatpush2.msra.mxu0 0.0
    %216 = vmatprep.subr.mxu0 0.0
    %217 = vmatpush2.msra.mxu0 0.0
    %218 = vmatprep.subr.mxu0 0.0
    %219 = vmatpush2.msra.mxu0 0.0
    %220 = vmatprep.subr.mxu0 0.0
    %221 = vmatpush2.msra.mxu0 0.0
    %222 = vmatprep.subr.mxu0 0.0
    %223 = vmatpush2.msra.mxu0 0.0
    %224 = vmatprep.mubr.f32.mxu0 0.0
    %225 = vmatmul.mubr.f32.gmra.mxu0 %v155
    %v226 = vpop.f32.mrf.mxu0
    %v227 = vadd.f32 %v159, %v226
    %v228 = vpop.f32.mrf.mxu0
    %229 = vdwg.mxu0
    %230 = vst [vmem:[#allocation8] sm:$0xff] %v227
    // Predicated region
    $region26: #{tpu_custom_call.1} parent=1 // pred_check
      _
    $region27: #{tpu_custom_call.1} parent=1 // pred_check_branch
      %232 = sbr.rel (0) target = $region29
    $region28: #{tpu_custom_call.1} parent=1 // pred_region
      %s234 = ssub.s32 128, 128
      %235 = vsyncadd [#allocation4], %s234
      %s237 = sshll.u32 [#allocation8], 4
      %s238 = int_to_ptr.vmem [resolvable:$true] %s237
      %240 = dma.vmem_to_hbm [thread:$0]  %s238, 128, %s3, [#allocation4]
    $region29: #{tpu_custom_call.1} parent=1 // pred_fallthru
      _
    // Predicated region
    $region30: #{tpu_custom_call.1} parent=1 // pred_check
      _
    $region31: #{tpu_custom_call.1} parent=1 // pred_check_branch
      %242 = sbr.rel (0) target = $region33
    $region32: #{tpu_custom_call.1} parent=1 // pred_region
      %243 = dma.done [#allocation4], 128
    $region33: #{tpu_custom_call.1} parent=1 // pred_fallthru
      _
    %244 = vsyncpa [#allocation3], 1
    %245 = vsyncpa [#allocation6], 1
    %246 = vsyncpa [#allocation4], 1

</llo_original>
